<compile_context>
chip_gen: v5e
topology: v5e:2x2
jax: 0.10.0
libtpu: 0.0.40
codegen_flags: <defaults>
</compile_context>

<pallas_src>
import functools

import jax
import jax.numpy as jnp
from jax.experimental import pallas as pl
from jax.experimental.pallas import tpu as pltpu


def decoder_kernel(
    emb_ref,      # (B, E)        embedded input token
    enc_ref,      # (B, S, 2H)    encoder states, lane-dense
    h_ref,        # (B, H)        previous hidden state (layer 0)
    c_ref,        # (B, H)        previous cell state   (layer 0)
    weh_ref,      # (1, H)        energy weight, hidden part
    wee_ref,      # (1, 1, 2H)    energy weight, encoder part
    be_ref,       # (1,)          energy bias (SMEM scalar)
    wctx_ref,     # (2H, 4H)      LSTM input-hidden weight, context part
    wemb_ref,     # (E, 4H)       LSTM input-hidden weight, embedding part
    whh_ref,      # (H, 4H)       LSTM hidden-hidden weight
    bg_ref,       # (1, 4H)       b_ih + b_hh
    wfc_ref,      # (H, TILE_O)   output projection weight, current O tile
    bfc_ref,      # (1, TILE_O)   output projection bias,   current O tile
    pred_ref,     # out: (B, TILE_O)
    hout_ref,     # out: (B, H)   resident across the O grid
    cout_ref,     # out: (B, H)   resident across the O grid
):
    H = h_ref.shape[1]

    # Attention + LSTM state: computed once (grid step 0); the resulting
    # h_new/c_new live in the (grid-resident) output refs for later O tiles.
    @pl.when(pl.program_id(0) == 0)
    def _compute_state():
        h = h_ref[...]                                            # (B, H)
        c = c_ref[...]                                            # (B, H)
        enc = enc_ref[...]                                        # (B, S, 2H)

        # --- attention energy: ReLU(h.We_h + enc.We_enc + b) -------------
        # VPU multiply + lane reduce (no concat, no N=1 MXU matmul, hidden
        # contribution computed once instead of S times).
        e_h = jnp.sum(h * weh_ref[...], axis=-1, keepdims=True)   # (B, 1)
        e_enc = jnp.sum(enc * wee_ref[...], axis=-1)              # (B, S)
        e = jnp.maximum(e_enc + e_h + be_ref[0], 0.0)             # (B, S)

        # --- softmax over S (lane axis) -----------------------------------
        e = e - jnp.max(e, axis=-1, keepdims=True)
        p = jnp.exp(e)
        att = p / jnp.sum(p, axis=-1, keepdims=True)              # (B, S)

        # --- context: batched S-reduction on the MXU -----------------------
        ctx = jnp.einsum(
            "bqs,bsh->bqh", att[:, None, :], enc,
            preferred_element_type=jnp.float32)[:, 0, :]          # (B, 2H)

        # --- single-step LSTM (PyTorch gate order: i, f, g, o) -------------
        # Split weights: no lane-axis concat of [context, emb].
        gates = (
            jnp.dot(ctx, wctx_ref[...], preferred_element_type=jnp.float32)
            + jnp.dot(emb_ref[...], wemb_ref[...],
                      preferred_element_type=jnp.float32)
            + jnp.dot(h, whh_ref[...], preferred_element_type=jnp.float32)
            + bg_ref[...])                                        # (B, 4H)
        i_g = jax.nn.sigmoid(gates[:, 0:H])
        f_g = jax.nn.sigmoid(gates[:, H:2 * H])
        g_g = jnp.tanh(gates[:, 2 * H:3 * H])
        o_g = jax.nn.sigmoid(gates[:, 3 * H:4 * H])
        c_new = f_g * c + i_g * g_g
        h_new = o_g * jnp.tanh(c_new)

        hout_ref[...] = h_new
        cout_ref[...] = c_new

    # --- output projection for the current O tile (runs every grid step) ---
    pred_ref[...] = (jnp.dot(hout_ref[...], wfc_ref[...],
                             preferred_element_type=jnp.float32)
                     + bfc_ref[...])


def _round_up(x, m):
    return (x + m - 1) // m * m


def init_params(key, input_size, embedding_size, hidden_size, output_size):
    """Raw PyTorch-layout parameters (as nn.Linear / nn.LSTM / nn.Embedding)."""
    ks = jax.random.split(key, 9)
    H, E = hidden_size, embedding_size

    def u(k, shape, fan_in):
        bound = 1.0 / jnp.sqrt(fan_in)
        return jax.random.uniform(k, shape, jnp.float32, -bound, bound)

    return dict(
        emb_table=u(ks[0], (input_size, E), E),
        W_energy=u(ks[1], (1, 3 * H), 3 * H),        # nn.Linear(3H, 1)
        b_energy=u(ks[2], (1,), 3 * H),
        W_ih=u(ks[3], (4 * H, 2 * H + E), H),        # nn.LSTM(2H+E, H)
        W_hh=u(ks[4], (4 * H, H), H),
        b_ih=u(ks[5], (4 * H,), H),
        b_hh=u(ks[6], (4 * H,), H),
        W_fc=u(ks[7], (output_size, H), H),          # nn.Linear(H, output_size)
        b_fc=u(ks[8], (output_size,), H),
    )


def prepare_decoder_params(params, *, max_tile_o=512):
    """One-time weight prep (transpose / split / pad), hoisted out of the
    per-token decode step. Returns (kernel_params, tile_o)."""
    H = params["W_hh"].shape[1]
    E = params["W_ih"].shape[1] - 2 * H
    O = params["W_fc"].shape[0]

    # Lane-dense, 128-aligned output tiling over the vocab axis.
    o_pad = _round_up(O, 128)
    tile_o = min(max_tile_o, o_pad)
    o_pad = _round_up(o_pad, tile_o)

    wfc = jnp.zeros((H, o_pad), jnp.float32).at[:, :O].set(params["W_fc"].T)
    bfc = jnp.zeros((1, o_pad), jnp.float32).at[:, :O].set(params["b_fc"][None, :])

    kparams = dict(
        emb_table=params["emb_table"],
        we_h=params["W_energy"][:, :H],                          # (1, H)
        we_enc=params["W_energy"][:, H:].reshape(1, 1, 2 * H),   # (1, 1, 2H)
        b_energy=params["b_energy"].reshape(1).astype(jnp.float32),  # (1,)
        w_ctx=params["W_ih"][:, :2 * H].T,                       # (2H, 4H)
        w_emb=params["W_ih"][:, 2 * H:].T,                       # (E, 4H)
        w_hh=params["W_hh"].T,                                   # (H, 4H)
        b_gates=(params["b_ih"] + params["b_hh"]).reshape(1, 4 * H),
        wfc=wfc,                                                 # (H, O_pad)
        bfc=bfc,                                                 # (1, O_pad)
    )
    return kparams, int(tile_o)


@functools.partial(jax.jit, static_argnames=("tile_o", "out_size"))
def decoder_forward(x_ids, enc_bsh, hidden, cell, kparams, *, tile_o, out_size):
    """One decode step. enc_bsh is (B, S, 2H) lane-dense (transpose encoder
    output once, outside the decode loop). Returns (pred (B,O), hidden (1,B,H),
    cell (1,B,H))."""
    B, S, H2 = enc_bsh.shape
    H = hidden.shape[-1]
    E = kparams["emb_table"].shape[1]
    o_pad = kparams["wfc"].shape[1]
    num_o_tiles = o_pad // tile_o

    emb = kparams["emb_table"][x_ids]            # (B, E) gather (glue)
    h0, c0 = hidden[0], cell[0]

    def full_spec(shape):
        # Whole-array block, same block for every grid step (VMEM-resident).
        return pl.BlockSpec(shape, lambda j, _n=len(shape): (0,) * _n)

    pred_pad, h_new, c_new = pl.pallas_call(
        decoder_kernel,
        grid=(num_o_tiles,),
        out_shape=(
            jax.ShapeDtypeStruct((B, o_pad), jnp.float32),
            jax.ShapeDtypeStruct((B, H), jnp.float32),
            jax.ShapeDtypeStruct((B, H), jnp.float32),
        ),
        in_specs=[
            full_spec((B, E)),                                    # emb
            full_spec((B, S, H2)),                                # enc
            full_spec((B, H)),                                    # h
            full_spec((B, H)),                                    # c
            full_spec((1, H)),                                    # we_h
            full_spec((1, 1, H2)),                                # we_enc
            pl.BlockSpec(memory_space=pltpu.MemorySpace.SMEM),    # b_energy
            full_spec((H2, 4 * H)),                               # w_ctx
            full_spec((E, 4 * H)),                                # w_emb
            full_spec((H, 4 * H)),                                # w_hh
            full_spec((1, 4 * H)),                                # b_gates
            pl.BlockSpec((H, tile_o), lambda j: (0, j)),          # wfc tile
            pl.BlockSpec((1, tile_o), lambda j: (0, j)),          # bfc tile
        ],
        out_specs=(
            pl.BlockSpec((B, tile_o), lambda j: (0, j)),          # pred tile
            full_spec((B, H)),                                    # h_out
            full_spec((B, H)),                                    # c_out
        ),
        compiler_params=pltpu.CompilerParams(
            dimension_semantics=("arbitrary",)),
    )(emb, enc_bsh, h0, c0,
      kparams["we_h"], kparams["we_enc"], kparams["b_energy"],
      kparams["w_ctx"], kparams["w_emb"], kparams["w_hh"], kparams["b_gates"],
      kparams["wfc"], kparams["bfc"])

    return pred_pad[:, :out_size], h_new[None], c_new[None]


def decoder_forward_ref(x_ids, encoder_state, hidden, cell, params):
    """Pure-JAX reference (PyTorch layout: encoder_state (S, B, 2H))."""
    S, B, _ = encoder_state.shape
    H = hidden.shape[-1]
    emb = params["emb_table"][x_ids]
    h0, c0 = hidden[0], cell[0]
    h_rep = jnp.broadcast_to(h0[None], (S, B, H))
    cat = jnp.concatenate([h_rep, encoder_state], axis=-1)
    e = jax.nn.relu(cat @ params["W_energy"].T + params["b_energy"])   # (S,B,1)
    att = jax.nn.softmax(e, axis=0)
    context = jnp.sum(att * encoder_state, axis=0)                     # (B, 2H)
    x_in = jnp.concatenate([context, emb], axis=-1)
    gates = (x_in @ params["W_ih"].T + params["b_ih"]
             + h0 @ params["W_hh"].T + params["b_hh"])
    i_g = jax.nn.sigmoid(gates[:, :H])
    f_g = jax.nn.sigmoid(gates[:, H:2 * H])
    g_g = jnp.tanh(gates[:, 2 * H:3 * H])
    o_g = jax.nn.sigmoid(gates[:, 3 * H:])
    c_new = f_g * c0 + i_g * g_g
    h_new = o_g * jnp.tanh(c_new)
    pred = h_new @ params["W_fc"].T + params["b_fc"]
    return pred, h_new[None], c_new[None]


if __name__ == "__main__":
    # small, module-consistent shapes
    B, S = 4, 8
    hidden_size = 32
    embedding_size = 32
    input_size = 40          # target vocab (embedding rows)
    output_size = 48         # len(target_lang.vocab) stand-in

    key = jax.random.PRNGKey(0)
    k_p, k_x, k_e, k_h, k_c = jax.random.split(key, 5)

    params = init_params(k_p, input_size, embedding_size, hidden_size, output_size)
    kparams, tile_o = prepare_decoder_params(params)     # hoisted, once

    x = jax.random.randint(k_x, (B,), 0, input_size, dtype=jnp.int32)
    encoder_state = jax.random.normal(k_e, (S, B, 2 * hidden_size), jnp.float32)
    hidden = jax.random.normal(k_h, (1, B, hidden_size), jnp.float32)
    cell = jax.random.normal(k_c, (1, B, hidden_size), jnp.float32)

    # Lane-dense encoder layout, transposed ONCE outside the decode loop.
    enc_bsh = jnp.transpose(encoder_state, (1, 0, 2))     # (B, S, 2H)

    pred, h_new, c_new = decoder_forward(
        x, enc_bsh, hidden, cell, kparams, tile_o=tile_o, out_size=output_size)
    jax.block_until_ready((pred, h_new, c_new))

    pred_r, h_r, c_r = decoder_forward_ref(x, encoder_state, hidden, cell, params)
    assert pred.shape == (B, output_size)
    assert h_new.shape == (1, B, hidden_size) and c_new.shape == (1, B, hidden_size)
    assert jnp.allclose(pred, pred_r, atol=1e-4, rtol=1e-4)
    assert jnp.allclose(h_new, h_r, atol=1e-4, rtol=1e-4)
    assert jnp.allclose(c_new, c_r, atol=1e-4, rtol=1e-4)

    # Small teacher-forced Seq2Seq-style decode loop (deterministic feed).
    # TODO(synk): random.random() teacher forcing / argmax feed stays host-side.
    T = 4
    targets = jax.random.randint(jax.random.PRNGKey(1), (T, B), 0, input_size,
                                 dtype=jnp.int32)
    h_k, c_k = hidden, cell
    h_j, c_j = hidden, cell
    xt = targets[0]
    for t in range(1, T):
        p_k, h_k, c_k = decoder_forward(xt, enc_bsh, h_k, c_k, kparams,
                                        tile_o=tile_o, out_size=output_size)
        p_j, h_j, c_j = decoder_forward_ref(xt, encoder_state, h_j, c_j, params)
        assert jnp.allclose(p_k, p_j, atol=1e-4, rtol=1e-4)
        xt = targets[t]
    jax.block_until_ready((h_k, c_k))

    print("KERNEL_OK")
</pallas_src>

<mosaic_0001>
module attributes {stable_mosaic.version = 11 : i64} {
  func.func @decoder_kernel(%arg0: i32, %arg1: memref<4x32xf32, #tpu.memory_space<vmem>>, %arg2: memref<4x8x64xf32, #tpu.memory_space<vmem>>, %arg3: memref<4x32xf32, #tpu.memory_space<vmem>>, %arg4: memref<4x32xf32, #tpu.memory_space<vmem>>, %arg5: memref<1x32xf32, #tpu.memory_space<vmem>>, %arg6: memref<1x1x64xf32, #tpu.memory_space<vmem>>, %arg7: memref<1xf32, #tpu.memory_space<smem>>, %arg8: memref<64x128xf32, #tpu.memory_space<vmem>>, %arg9: memref<32x128xf32, #tpu.memory_space<vmem>>, %arg10: memref<32x128xf32, #tpu.memory_space<vmem>>, %arg11: memref<1x128xf32, #tpu.memory_space<vmem>>, %arg12: memref<32x128xf32, #tpu.memory_space<vmem>>, %arg13: memref<1x128xf32, #tpu.memory_space<vmem>>, %arg14: memref<4x128xf32, #tpu.memory_space<vmem>>, %arg15: memref<4x32xf32, #tpu.memory_space<vmem>>, %arg16: memref<4x32xf32, #tpu.memory_space<vmem>>) attributes {dimension_semantics = [#tpu.dimension_semantics<arbitrary>], iteration_bounds = array<i64: 1>, scalar_prefetch = 0 : i64, scratch_operands = 0 : i64, tpu.core_type = #tpu.core_type<tc>, window_params = [{pipeline_mode = #tpu.pipeline_mode<synchronous>, transform_indices = @transform_0, window_bounds = array<i64: 4, 32>}, {pipeline_mode = #tpu.pipeline_mode<synchronous>, transform_indices = @transform_1, window_bounds = array<i64: 4, 8, 64>}, {pipeline_mode = #tpu.pipeline_mode<synchronous>, transform_indices = @transform_2, window_bounds = array<i64: 4, 32>}, {pipeline_mode = #tpu.pipeline_mode<synchronous>, transform_indices = @transform_3, window_bounds = array<i64: 4, 32>}, {pipeline_mode = #tpu.pipeline_mode<synchronous>, transform_indices = @transform_4, window_bounds = array<i64: 1, 32>}, {pipeline_mode = #tpu.pipeline_mode<synchronous>, transform_indices = @transform_5, window_bounds = array<i64: 1, 1, 64>}, {transform_indices = @transform_6, window_bounds = array<i64: 1>}, {pipeline_mode = #tpu.pipeline_mode<synchronous>, transform_indices = @transform_7, window_bounds = array<i64: 64, 128>}, {pipeline_mode = #tpu.pipeline_mode<synchronous>, transform_indices = @transform_8, window_bounds = array<i64: 32, 128>}, {pipeline_mode = #tpu.pipeline_mode<synchronous>, transform_indices = @transform_9, window_bounds = array<i64: 32, 128>}, {pipeline_mode = #tpu.pipeline_mode<synchronous>, transform_indices = @transform_10, window_bounds = array<i64: 1, 128>}, {transform_indices = @transform_11, window_bounds = array<i64: 32, 128>}, {transform_indices = @transform_12, window_bounds = array<i64: 1, 128>}, {transform_indices = @transform_13, window_bounds = array<i64: 4, 128>}, {pipeline_mode = #tpu.pipeline_mode<synchronous>, transform_indices = @transform_14, window_bounds = array<i64: 4, 32>}, {pipeline_mode = #tpu.pipeline_mode<synchronous>, transform_indices = @transform_15, window_bounds = array<i64: 4, 32>}]} {
    %c0_i32 = arith.constant 0 : i32
    %0 = arith.cmpi eq, %arg0, %c0_i32 : i32
    %1 = arith.extui %0 : i1 to i32
    %c0_i32_0 = arith.constant 0 : i32
    %2 = arith.cmpi ne, %1, %c0_i32_0 : i32
    scf.if %2 {
      %c0_8 = arith.constant 0 : index
      %c0_9 = arith.constant 0 : index
      %10 = vector.load %arg3[%c0_8, %c0_9] : memref<4x32xf32, #tpu.memory_space<vmem>>, vector<4x32xf32>
      %c0_10 = arith.constant 0 : index
      %c0_11 = arith.constant 0 : index
      %11 = vector.load %arg4[%c0_10, %c0_11] : memref<4x32xf32, #tpu.memory_space<vmem>>, vector<4x32xf32>
      %c0_12 = arith.constant 0 : index
      %c0_13 = arith.constant 0 : index
      %c0_14 = arith.constant 0 : index
      %12 = vector.load %arg2[%c0_12, %c0_13, %c0_14] : memref<4x8x64xf32, #tpu.memory_space<vmem>>, vector<4x8x64xf32>
      %c0_15 = arith.constant 0 : index
      %c0_16 = arith.constant 0 : index
      %13 = vector.load %arg5[%c0_15, %c0_16] : memref<1x32xf32, #tpu.memory_space<vmem>>, vector<1x32xf32>
      %14 = vector.broadcast %13 : vector<1x32xf32> to vector<4x32xf32>
      %15 = arith.mulf %10, %14 : vector<4x32xf32>
      %cst_17 = arith.constant dense<0.000000e+00> : vector<4xf32>
      %16 = vector.multi_reduction <add>, %15, %cst_17 [1] : vector<4x32xf32> to vector<4xf32>
      %17 = vector.shape_cast %16 : vector<4xf32> to vector<4x1xf32>
      %c0_18 = arith.constant 0 : index
      %c0_19 = arith.constant 0 : index
      %c0_20 = arith.constant 0 : index
      %18 = vector.load %arg6[%c0_18, %c0_19, %c0_20] : memref<1x1x64xf32, #tpu.memory_space<vmem>>, vector<1x1x64xf32>
      %19 = vector.broadcast %18 : vector<1x1x64xf32> to vector<4x8x64xf32>
      %20 = arith.mulf %12, %19 : vector<4x8x64xf32>
      %cst_21 = arith.constant dense<0.000000e+00> : vector<4x8xf32>
      %21 = vector.multi_reduction <add>, %20, %cst_21 [2] : vector<4x8x64xf32> to vector<4x8xf32>
      %22 = vector.broadcast %17 : vector<4x1xf32> to vector<4x8xf32>
      %23 = arith.addf %21, %22 : vector<4x8xf32>
      %c0_22 = arith.constant 0 : index
      %24 = memref.load %arg7[%c0_22] : memref<1xf32, #tpu.memory_space<smem>>
      %25 = vector.broadcast %24 : f32 to vector<4x8xf32>
      %26 = arith.addf %23, %25 : vector<4x8xf32>
      %cst_23 = arith.constant 0.000000e+00 : f32
      %27 = vector.broadcast %cst_23 : f32 to vector<4x8xf32>
      %28 = arith.maximumf %26, %27 : vector<4x8xf32>
      %cst_24 = arith.constant dense<0xFF800000> : vector<4xf32>
      %29 = vector.multi_reduction <maximumf>, %28, %cst_24 [1] : vector<4x8xf32> to vector<4xf32>
      %30 = vector.shape_cast %29 : vector<4xf32> to vector<4x1xf32>
      %31 = vector.broadcast %30 : vector<4x1xf32> to vector<4x8xf32>
      %32 = arith.subf %28, %31 : vector<4x8xf32>
      %33 = math.exp %32 : vector<4x8xf32>
      %cst_25 = arith.constant dense<0.000000e+00> : vector<4xf32>
      %34 = vector.multi_reduction <add>, %33, %cst_25 [1] : vector<4x8xf32> to vector<4xf32>
      %35 = vector.shape_cast %34 : vector<4xf32> to vector<4x1xf32>
      %36 = vector.broadcast %35 : vector<4x1xf32> to vector<4x8xf32>
      %37 = arith.divf %33, %36 : vector<4x8xf32>
      %38 = vector.shape_cast %37 : vector<4x8xf32> to vector<4x1x8xf32>
      "tpu.trace_start"() <{level = 10 : i32, message = "bqs,bsh->bqh"}> : () -> ()
      %cst_26 = arith.constant dense<0.000000e+00> : vector<4x1x64xf32>
      %39 = tpu.matmul %38, %12, %cst_26 {dimension_numbers = #tpu.dot_dimension_numbers<[2], [1], [1], [2], [0, 0, 0, 1, 1, 2], [0], [0]>} : vector<4x1x8xf32>, vector<4x8x64xf32>, vector<4x1x64xf32> -> vector<4x1x64xf32>
      "tpu.trace_stop"() : () -> ()
      %40 = vector.shape_cast %39 : vector<4x1x64xf32> to vector<4x64xf32>
      %c0_27 = arith.constant 0 : index
      %c0_28 = arith.constant 0 : index
      %41 = vector.load %arg8[%c0_27, %c0_28] : memref<64x128xf32, #tpu.memory_space<vmem>>, vector<64x128xf32>
      %cst_29 = arith.constant dense<0.000000e+00> : vector<4x128xf32>
      %42 = tpu.matmul %40, %41, %cst_29 {dimension_numbers = #tpu.dot_dimension_numbers<[1], [0], [0], [1], [0, 0, 1, 1], [], []>} : vector<4x64xf32>, vector<64x128xf32>, vector<4x128xf32> -> vector<4x128xf32>
      %c0_30 = arith.constant 0 : index
      %c0_31 = arith.constant 0 : index
      %43 = vector.load %arg1[%c0_30, %c0_31] : memref<4x32xf32, #tpu.memory_space<vmem>>, vector<4x32xf32>
      %c0_32 = arith.constant 0 : index
      %c0_33 = arith.constant 0 : index
      %44 = vector.load %arg9[%c0_32, %c0_33] : memref<32x128xf32, #tpu.memory_space<vmem>>, vector<32x128xf32>
      %cst_34 = arith.constant dense<0.000000e+00> : vector<4x128xf32>
      %45 = tpu.matmul %43, %44, %cst_34 {dimension_numbers = #tpu.dot_dimension_numbers<[1], [0], [0], [1], [0, 0, 1, 1], [], []>} : vector<4x32xf32>, vector<32x128xf32>, vector<4x128xf32> -> vector<4x128xf32>
      %46 = arith.addf %42, %45 : vector<4x128xf32>
      %c0_35 = arith.constant 0 : index
      %c0_36 = arith.constant 0 : index
      %47 = vector.load %arg10[%c0_35, %c0_36] : memref<32x128xf32, #tpu.memory_space<vmem>>, vector<32x128xf32>
      %cst_37 = arith.constant dense<0.000000e+00> : vector<4x128xf32>
      %48 = tpu.matmul %10, %47, %cst_37 {dimension_numbers = #tpu.dot_dimension_numbers<[1], [0], [0], [1], [0, 0, 1, 1], [], []>} : vector<4x32xf32>, vector<32x128xf32>, vector<4x128xf32> -> vector<4x128xf32>
      %49 = arith.addf %46, %48 : vector<4x128xf32>
      %c0_38 = arith.constant 0 : index
      %c0_39 = arith.constant 0 : index
      %50 = vector.load %arg11[%c0_38, %c0_39] : memref<1x128xf32, #tpu.memory_space<vmem>>, vector<1x128xf32>
      %51 = vector.broadcast %50 : vector<1x128xf32> to vector<4x128xf32>
      %52 = arith.addf %49, %51 : vector<4x128xf32>
      %53 = vector.extract_strided_slice %52 {offsets = [0, 0], sizes = [4, 32], strides = [1, 1]} : vector<4x128xf32> to vector<4x32xf32>
      %54 = arith.negf %53 : vector<4x32xf32>
      %55 = math.exp %54 : vector<4x32xf32>
      %cst_40 = arith.constant 1.000000e+00 : f32
      %56 = vector.broadcast %cst_40 : f32 to vector<4x32xf32>
      %57 = arith.addf %56, %55 : vector<4x32xf32>
      %58 = arith.divf %56, %57 : vector<4x32xf32>
      %59 = vector.extract_strided_slice %52 {offsets = [0, 32], sizes = [4, 32], strides = [1, 1]} : vector<4x128xf32> to vector<4x32xf32>
      %60 = arith.negf %59 : vector<4x32xf32>
      %61 = math.exp %60 : vector<4x32xf32>
      %cst_41 = arith.constant 1.000000e+00 : f32
      %62 = vector.broadcast %cst_41 : f32 to vector<4x32xf32>
      %63 = arith.addf %62, %61 : vector<4x32xf32>
      %64 = arith.divf %62, %63 : vector<4x32xf32>
      %65 = vector.extract_strided_slice %52 {offsets = [0, 64], sizes = [4, 32], strides = [1, 1]} : vector<4x128xf32> to vector<4x32xf32>
      %66 = math.tanh %65 : vector<4x32xf32>
      %67 = vector.extract_strided_slice %52 {offsets = [0, 96], sizes = [4, 32], strides = [1, 1]} : vector<4x128xf32> to vector<4x32xf32>
      %68 = arith.negf %67 : vector<4x32xf32>
      %69 = math.exp %68 : vector<4x32xf32>
      %cst_42 = arith.constant 1.000000e+00 : f32
      %70 = vector.broadcast %cst_42 : f32 to vector<4x32xf32>
      %71 = arith.addf %70, %69 : vector<4x32xf32>
      %72 = arith.divf %70, %71 : vector<4x32xf32>
      %73 = arith.mulf %64, %11 : vector<4x32xf32>
      %74 = arith.mulf %58, %66 : vector<4x32xf32>
      %75 = arith.addf %73, %74 : vector<4x32xf32>
      %76 = math.tanh %75 : vector<4x32xf32>
      %77 = arith.mulf %72, %76 : vector<4x32xf32>
      %c0_43 = arith.constant 0 : index
      %c0_44 = arith.constant 0 : index
      %78 = vector.load %arg15[%c0_43, %c0_44] : memref<4x32xf32, #tpu.memory_space<vmem>>, vector<4x32xf32>
      tpu.vector_store %arg15[%c0_43, %c0_44], %77 {strides = array<i32>} : memref<4x32xf32, #tpu.memory_space<vmem>>, vector<4x32xf32>,
      %c0_45 = arith.constant 0 : index
      %c0_46 = arith.constant 0 : index
      %79 = vector.load %arg16[%c0_45, %c0_46] : memref<4x32xf32, #tpu.memory_space<vmem>>, vector<4x32xf32>
      tpu.vector_store %arg16[%c0_45, %c0_46], %75 {strides = array<i32>} : memref<4x32xf32, #tpu.memory_space<vmem>>, vector<4x32xf32>,
    } else {
    }
    %c0 = arith.constant 0 : index
    %c0_1 = arith.constant 0 : index
    %3 = vector.load %arg15[%c0, %c0_1] : memref<4x32xf32, #tpu.memory_space<vmem>>, vector<4x32xf32>
    %c0_2 = arith.constant 0 : index
    %c0_3 = arith.constant 0 : index
    %4 = vector.load %arg12[%c0_2, %c0_3] : memref<32x128xf32, #tpu.memory_space<vmem>>, vector<32x128xf32>
    %cst = arith.constant dense<0.000000e+00> : vector<4x128xf32>
    %5 = tpu.matmul %3, %4, %cst {dimension_numbers = #tpu.dot_dimension_numbers<[1], [0], [0], [1], [0, 0, 1, 1], [], []>} : vector<4x32xf32>, vector<32x128xf32>, vector<4x128xf32> -> vector<4x128xf32>
    %c0_4 = arith.constant 0 : index
    %c0_5 = arith.constant 0 : index
    %6 = vector.load %arg13[%c0_4, %c0_5] : memref<1x128xf32, #tpu.memory_space<vmem>>, vector<1x128xf32>
    %7 = vector.broadcast %6 : vector<1x128xf32> to vector<4x128xf32>
    %8 = arith.addf %5, %7 : vector<4x128xf32>
    %c0_6 = arith.constant 0 : index
    %c0_7 = arith.constant 0 : index
    %9 = vector.load %arg14[%c0_6, %c0_7] : memref<4x128xf32, #tpu.memory_space<vmem>>, vector<4x128xf32>
    tpu.vector_store %arg14[%c0_6, %c0_7], %8 {strides = array<i32>} : memref<4x128xf32, #tpu.memory_space<vmem>>, vector<4x128xf32>,
    return
  }
  func.func @transform_0(%arg0: i32) -> (i32, i32) {
    %c0_i32 = arith.constant 0 : i32
    %c0_i32_0 = arith.constant 0 : i32
    %c0_i32_1 = arith.constant 0 : i32
    return %c0_i32, %c0_i32_0 : i32, i32
  }
  func.func @transform_1(%arg0: i32) -> (i32, i32, i32) {
    %c0_i32 = arith.constant 0 : i32
    %c0_i32_0 = arith.constant 0 : i32
    %c0_i32_1 = arith.constant 0 : i32
    %c0_i32_2 = arith.constant 0 : i32
    return %c0_i32, %c0_i32_0, %c0_i32_1 : i32, i32, i32
  }
  func.func @transform_2(%arg0: i32) -> (i32, i32) {
    %c0_i32 = arith.constant 0 : i32
    %c0_i32_0 = arith.constant 0 : i32
    %c0_i32_1 = arith.constant 0 : i32
    return %c0_i32, %c0_i32_0 : i32, i32
  }
  func.func @transform_3(%arg0: i32) -> (i32, i32) {
    %c0_i32 = arith.constant 0 : i32
    %c0_i32_0 = arith.constant 0 : i32
    %c0_i32_1 = arith.constant 0 : i32
    return %c0_i32, %c0_i32_0 : i32, i32
  }
  func.func @transform_4(%arg0: i32) -> (i32, i32) {
    %c0_i32 = arith.constant 0 : i32
    %c0_i32_0 = arith.constant 0 : i32
    %c0_i32_1 = arith.constant 0 : i32
    return %c0_i32, %c0_i32_0 : i32, i32
  }
  func.func @transform_5(%arg0: i32) -> (i32, i32, i32) {
    %c0_i32 = arith.constant 0 : i32
    %c0_i32_0 = arith.constant 0 : i32
    %c0_i32_1 = arith.constant 0 : i32
    %c0_i32_2 = arith.constant 0 : i32
    return %c0_i32, %c0_i32_0, %c0_i32_1 : i32, i32, i32
  }
  func.func @transform_6(%arg0: i32) -> i32 {
    %c0_i32 = arith.constant 0 : i32
    %c0_i32_0 = arith.constant 0 : i32
    return %c0_i32 : i32
  }
  func.func @transform_7(%arg0: i32) -> (i32, i32) {
    %c0_i32 = arith.constant 0 : i32
    %c0_i32_0 = arith.constant 0 : i32
    %c0_i32_1 = arith.constant 0 : i32
    return %c0_i32, %c0_i32_0 : i32, i32
  }
  func.func @transform_8(%arg0: i32) -> (i32, i32) {
    %c0_i32 = arith.constant 0 : i32
    %c0_i32_0 = arith.constant 0 : i32
    %c0_i32_1 = arith.constant 0 : i32
    return %c0_i32, %c0_i32_0 : i32, i32
  }
  func.func @transform_9(%arg0: i32) -> (i32, i32) {
    %c0_i32 = arith.constant 0 : i32
    %c0_i32_0 = arith.constant 0 : i32
    %c0_i32_1 = arith.constant 0 : i32
    return %c0_i32, %c0_i32_0 : i32, i32
  }
  func.func @transform_10(%arg0: i32) -> (i32, i32) {
    %c0_i32 = arith.constant 0 : i32
    %c0_i32_0 = arith.constant 0 : i32
    %c0_i32_1 = arith.constant 0 : i32
    return %c0_i32, %c0_i32_0 : i32, i32
  }
  func.func @transform_11(%arg0: i32) -> (i32, i32) {
    %c0_i32 = arith.constant 0 : i32
    %c0_i32_0 = arith.constant 0 : i32
    return %c0_i32, %arg0 : i32, i32
  }
  func.func @transform_12(%arg0: i32) -> (i32, i32) {
    %c0_i32 = arith.constant 0 : i32
    %c0_i32_0 = arith.constant 0 : i32
    return %c0_i32, %arg0 : i32, i32
  }
  func.func @transform_13(%arg0: i32) -> (i32, i32) {
    %c0_i32 = arith.constant 0 : i32
    %c0_i32_0 = arith.constant 0 : i32
    return %c0_i32, %arg0 : i32, i32
  }
  func.func @transform_14(%arg0: i32) -> (i32, i32) {
    %c0_i32 = arith.constant 0 : i32
    %c0_i32_0 = arith.constant 0 : i32
    %c0_i32_1 = arith.constant 0 : i32
    return %c0_i32, %c0_i32_0 : i32, i32
  }
  func.func @transform_15(%arg0: i32) -> (i32, i32) {
    %c0_i32 = arith.constant 0 : i32
    %c0_i32_0 = arith.constant 0 : i32
    %c0_i32_1 = arith.constant 0 : i32
    return %c0_i32, %c0_i32_0 : i32, i32
  }
}

</mosaic_0001>

<llo_original>
// kernel: decoder_forward.1
$region0: #{decoder_forward.1}
  #allocation0 [shape = 'u32[]', space=smem, size = 0x4, offset = 0x4, fixed_abs, tag = 'smem constant byte address 0x4 - core index']
  #allocation1 [shape = 'u32[72,128]{1,0:T(1,128)}', space=vmem, size = 0x9000, scoped, tag = 'internal scratch']
  #allocation2 [shape = 'f32[1]{0:T(128)S(6)}', space=smem, size = 0x200, scoped, tag = 'scoped memory for decoder_forward.1']
  %s0 = inlined_call_operand.vmem [shape: f32[4,32], index: 0, kind: input, shape index: {}]
  %s1 = inlined_call_operand.vmem [shape: f32[4,8,64], index: 1, kind: input, shape index: {}]
  %s2 = inlined_call_operand.vmem [shape: f32[4,32], index: 2, kind: input, shape index: {}]
  %s3 = inlined_call_operand.vmem [shape: f32[4,32], index: 3, kind: input, shape index: {}]
  %s4 = inlined_call_operand.vmem [shape: f32[1,32], index: 4, kind: input, shape index: {}]
  %s5 = inlined_call_operand.vmem [shape: f32[1,1,64], index: 5, kind: input, shape index: {}]
  %s6 = inlined_call_operand.<no memory space> [shape: f32[1], index: 6, kind: input, shape index: {}]
  %s7 = inlined_call_operand.vmem [shape: f32[64,128], index: 7, kind: input, shape index: {}]
  %s8 = inlined_call_operand.hbm [shape: f32[32,128], index: 8, kind: input, shape index: {}]
  %s9 = inlined_call_operand.hbm [shape: f32[32,128], index: 9, kind: input, shape index: {}]
  %s10 = inlined_call_operand.vmem [shape: f32[1,128], index: 10, kind: input, shape index: {}]
  %s11 = inlined_call_operand.hbm [shape: f32[32,128], index: 11, kind: input, shape index: {}]
  %s12 = inlined_call_operand.vmem [shape: f32[1,128], index: 12, kind: input, shape index: {}]
  %s13 = inlined_call_operand.hbm [shape: f32[4,128], index: 13, kind: output, shape index: {0}]
  %s14 = inlined_call_operand.hbm [shape: f32[4,32], index: 14, kind: output, shape index: {1}]
  %s15 = inlined_call_operand.hbm [shape: f32[4,32], index: 15, kind: output, shape index: {2}]
  %16 = xla_tuple %s13, %s14, %s15
  %s17 = sld [smem:[#allocation0]]
  $region94: #{decoder_forward.1} parent=0
    _
  %s19 = ssub.s32 1, %s17
  %s20 = scalar_select 0, %s19, %s17
  %21 = sst [smem:[#allocation2]] %s6
  $region1: #{decoder_forward.1} parent=0
    #allocation3 [shape = 'u8[16384]{0}', space=vmem, size = 0x4000, scoped, tag = 'input window, operand 8, single buffered']
    #allocation4 [shape = 's32[1]{0}', space=sflag, size = 0x4, scoped, tag = 'scoped memory for decoder_forward.1']
    #allocation5 [shape = 's32[1]{0}', space=sflag, size = 0x4, scoped, tag = 'scoped memory for decoder_forward.1']
    #allocation6 [shape = 'u8[16384]{0}', space=vmem, size = 0x4000, scoped, tag = 'input window, operand 9, single buffered']
    #allocation7 [shape = 's32[1]{0}', space=sflag, size = 0x4, scoped, tag = 'scoped memory for decoder_forward.1']
    #allocation8 [shape = 'u8[16384]{0}', space=vmem, size = 0x4000, scoped, tag = 'input window, operand 11, single buffered']
    #allocation9 [shape = 'u8[2048]{0}', space=vmem, size = 0x800, scoped, tag = 'output window, operand 0, single buffered']
    #allocation10 [shape = 'u8[2048]{0}', space=vmem, size = 0x800, scoped, tag = 'output window, operand 1, single buffered']
    #allocation11 [shape = 's32[1]{0}', space=sflag, size = 0x4, scoped, tag = 'scoped memory for decoder_forward.1']
    #allocation12 [shape = 'u8[2048]{0}', space=vmem, size = 0x800, scoped, tag = 'output window, operand 2, single buffered']
    %22 = vsyncpa [#allocation4], 0
    %23 = vsyncpa [#allocation7], 0
    %24 = vsyncpa [#allocation5], 0
    %25 = vsyncpa [#allocation11], 0
    // Predicated region
    $region2: #{decoder_forward.1} parent=1 // pred_check
      _
    $region3: #{decoder_forward.1} parent=1 // pred_check_branch
      %27 = sbr.rel (0) target = $region5
    $region4: #{decoder_forward.1} parent=1 // pred_region
      _
    $region5: #{decoder_forward.1} parent=1 // pred_fallthru
      _
    // Predicated region
    $region6: #{decoder_forward.1} parent=1 // pred_check
      _
    $region7: #{decoder_forward.1} parent=1 // pred_check_branch
      %29 = sbr.rel (0) target = $region9
    $region8: #{decoder_forward.1} parent=1 // pred_region
      _
    $region9: #{decoder_forward.1} parent=1 // pred_fallthru
      _
    // Predicated region
    $region10: #{decoder_forward.1} parent=1 // pred_check
      _
    $region11: #{decoder_forward.1} parent=1 // pred_check_branch
      %31 = sbr.rel (0) target = $region13
    $region12: #{decoder_forward.1} parent=1 // pred_region
      _
    $region13: #{decoder_forward.1} parent=1 // pred_fallthru
      _
    // Predicated region
    $region14: #{decoder_forward.1} parent=1 // pred_check
      _
    $region15: #{decoder_forward.1} parent=1 // pred_check_branch
      %33 = sbr.rel (0) target = $region17
    $region16: #{decoder_forward.1} parent=1 // pred_region
      _
    $region17: #{decoder_forward.1} parent=1 // pred_fallthru
      _
    // Predicated region
    $region18: #{decoder_forward.1} parent=1 // pred_check
      _
    $region19: #{decoder_forward.1} parent=1 // pred_check_branch
      %35 = sbr.rel (0) target = $region21
    $region20: #{decoder_forward.1} parent=1 // pred_region
      _
    $region21: #{decoder_forward.1} parent=1 // pred_fallthru
      _
    // Predicated region
    $region22: #{decoder_forward.1} parent=1 // pred_check
      _
    $region23: #{decoder_forward.1} parent=1 // pred_check_branch
      %37 = sbr.rel (0) target = $region25
    $region24: #{decoder_forward.1} parent=1 // pred_region
      _
    $region25: #{decoder_forward.1} parent=1 // pred_fallthru
      _
    // Predicated region
    $region26: #{decoder_forward.1} parent=1 // pred_check
      _
    $region27: #{decoder_forward.1} parent=1 // pred_check_branch
      %39 = sbr.rel (0) target = $region29
    $region28: #{decoder_forward.1} parent=1 // pred_region
      _
    $region29: #{decoder_forward.1} parent=1 // pred_fallthru
      _
    // Predicated region
    $region30: #{decoder_forward.1} parent=1 // pred_check
      _
    $region31: #{decoder_forward.1} parent=1 // pred_check_branch
      %41 = sbr.rel (0) target = $region33
    $region32: #{decoder_forward.1} parent=1 // pred_region
      _
    $region33: #{decoder_forward.1} parent=1 // pred_fallthru
      _
    // Predicated region
    $region34: #{decoder_forward.1} parent=1 // pred_check
      _
    $region35: #{decoder_forward.1} parent=1 // pred_check_branch
      %43 = sbr.rel (0) target = $region37
    $region36: #{decoder_forward.1} parent=1 // pred_region
      %45 = vsyncadd [#allocation4], 0
      %s46 = sshll.u32 %s8, 4
      %s47 = int_to_ptr.hbm [resolvable:$true] %s46
      %s48 = sshll.u32 [#allocation3], 4
      %s49 = int_to_ptr.vmem [resolvable:$true] %s48
      %54 = dma.hbm_to_vmem [thread:$0]  %s47, 512, %s49, [#allocation4], 128, 128, 8
    $region37: #{decoder_forward.1} parent=1 // pred_fallthru
      _
    // Predicated region
    $region38: #{decoder_forward.1} parent=1 // pred_check
      _
    $region39: #{decoder_forward.1} parent=1 // pred_check_branch
      %56 = sbr.rel (0) target = $region41
    $region40: #{decoder_forward.1} parent=1 // pred_region
      %58 = vsyncadd [#allocation7], 0
      %s59 = sshll.u32 %s9, 4
      %s60 = int_to_ptr.hbm [resolvable:$true] %s59
      %s61 = sshll.u32 [#allocation6], 4
      %s62 = int_to_ptr.vmem [resolvable:$true] %s61
      %67 = dma.hbm_to_vmem [thread:$0]  %s60, 512, %s62, [#allocation7], 128, 128, 8
    $region41: #{decoder_forward.1} parent=1 // pred_fallthru
      _
    // Predicated region
    $region42: #{decoder_forward.1} parent=1 // pred_check
      _
    $region43: #{decoder_forward.1} parent=1 // pred_check_branch
      %69 = sbr.rel (0) target = $region45
    $region44: #{decoder_forward.1} parent=1 // pred_region
      _
    $region45: #{decoder_forward.1} parent=1 // pred_fallthru
      _
    // Predicated region
    $region46: #{decoder_forward.1} parent=1 // pred_check
      _
    $region47: #{decoder_forward.1} parent=1 // pred_check_branch
      %71 = sbr.rel (0) target = $region49
    $region48: #{decoder_forward.1} parent=1 // pred_region
      %73 = vsyncadd [#allocation7], 0
      %s74 = sshll.u32 %s11, 4
      %s75 = int_to_ptr.hbm [resolvable:$true] %s74
      %s76 = sshll.u32 [#allocation8], 4
      %s77 = int_to_ptr.vmem [resolvable:$true] %s76
      %82 = dma.hbm_to_vmem [thread:$0]  %s75, 512, %s77, [#allocation7], 128, 128, 8
    $region49: #{decoder_forward.1} parent=1 // pred_fallthru
      _
    // Predicated region
    $region50: #{decoder_forward.1} parent=1 // pred_check
      _
    $region51: #{decoder_forward.1} parent=1 // pred_check_branch
      %84 = sbr.rel (0) target = $region53
    $region52: #{decoder_forward.1} parent=1 // pred_region
      _
    $region53: #{decoder_forward.1} parent=1 // pred_fallthru
      _
    // Predicated region
    $region54: #{decoder_forward.1} parent=1 // pred_check
      _
    $region55: #{decoder_forward.1} parent=1 // pred_check_branch
      %86 = sbr.rel (0) target = $region57
    $region56: #{decoder_forward.1} parent=1 // pred_region
      %88 = dma.done [#allocation4], 512
    $region57: #{decoder_forward.1} parent=1 // pred_fallthru
      _
    // Predicated region
    $region58: #{decoder_forward.1} parent=1 // pred_check
      _
    $region59: #{decoder_forward.1} parent=1 // pred_check_branch
      %90 = sbr.rel (0) target = $region61
    $region60: #{decoder_forward.1} parent=1 // pred_region
      %92 = dma.done [#allocation7], 512
    $region61: #{decoder_forward.1} parent=1 // pred_fallthru
      _
    // Predicated region
    $region62: #{decoder_forward.1} parent=1 // pred_check
      _
    $region63: #{decoder_forward.1} parent=1 // pred_check_branch
      %94 = sbr.rel (0) target = $region65
    $region64: #{decoder_forward.1} parent=1 // pred_region
      %96 = dma.done [#allocation7], 512
    $region65: #{decoder_forward.1} parent=1 // pred_fallthru
      _
    %p97 = scmp.eq.s32.totalorder 0, 0
    // Predicated region
    $region66: #{decoder_forward.1} parent=1 // pred_check
      %p98 = pneg %p97
    $region67: #{decoder_forward.1} parent=1 // pred_check_branch
      %100 = sbr.rel (%p98) target = $region69
    $region68: #{decoder_forward.1} parent=1 // pred_region
      %v101 = vld [vmem:[%s2] sm:$0xf]
      %v102 = vld [vmem:[%s3] sm:$0xf]
      %v103 = vld [vmem:[%s1] sm:$0xff]
      %v104 = vld [vmem:[%s1 + $0x8] sm:$0xff]
      %v105 = vld [vmem:[%s1 + $0x10] sm:$0xff]
      %v106 = vld [vmem:[%s1 + $0x18] sm:$0xff]
      %v107 = vld [vmem:[%s4] sm:$0x1]
      %v109 = vperm.slane %v107, 0
      %v111 = vmul.f32 %v101, %v109
      %vm112 = vcmask 257024
      %v113 = vsel %vm112, %v111, 0.0
      %114 = vadd.xlane.f32.xlu0 %v113
      %v115 = vpop.xlane.xlu0 %114
      %v116 = vld [vmem:[%s5] sm:$0x1]
      %v118 = vperm.slane %v116, 0
      %v120 = vmul.f32 %v103, %v118
      %v121 = vmul.f32 %v104, %v118
      %v122 = vmul.f32 %v105, %v118
      %v123 = vmul.f32 %v106, %v118
      %vm124 = vcmask 523264
      %v125 = vsel %vm124, %v120, 0.0
      %126 = vadd.xlane.f32.xlu0 %v125
      %v127 = vpop.xlane.xlu0 %126
      %v128 = vsel %vm124, %v121, 0.0
      %129 = vadd.xlane.f32.xlu0 %v128
      %v130 = vpop.xlane.xlu0 %129
      %v131 = vsel %vm124, %v122, 0.0
      %132 = vadd.xlane.f32.xlu0 %v131
      %v133 = vpop.xlane.xlu0 %132
      %v134 = vsel %vm124, %v123, 0.0
      %135 = vadd.xlane.f32.xlu0 %v134
      %v136 = vpop.xlane.xlu0 %135
      %v138 = vperm.slane %v115, 0
      %v139 = vperm.slane %v115, 1
      %v140 = vperm.slane %v115, 2
      %v141 = vperm.slane %v115, 3
      %v146 = vadd.f32 %v127, %v138
      %v147 = vadd.f32 %v130, %v139
      %v148 = vadd.f32 %v133, %v140
      %v149 = vadd.f32 %v136, %v141
      %s150 = sld [smem:[#allocation2]]
      %v151 = vstv %s150
      %v152 = vadd.f32 %v146, %v151
      %v153 = vadd.f32 %v147, %v151
      %v154 = vadd.f32 %v148, %v151
      %v155 = vadd.f32 %v149, %v151
      %v156 = vmax.f32 %v152, 0.0
      %v157 = vmax.f32 %v153, 0.0
      %v158 = vmax.f32 %v154, 0.0
      %v159 = vmax.f32 %v155, 0.0
      %164 = vset.pattern.permute.xlu0 0
      %165 = vperm.xlu0 %164, %v156
      %v166 = vpop.permute.xlu0 %165
      %167 = vset.pattern.permute.xlu0 0
      %168 = vperm.xlu0 %167, %v157
      %v169 = vpop.permute.xlu0 %168
      %170 = vset.pattern.permute.xlu0 0
      %171 = vperm.xlu0 %170, %v158
      %v172 = vpop.permute.xlu0 %171
      %173 = vset.pattern.permute.xlu0 0
      %174 = vperm.xlu0 %173, %v159
      %v175 = vpop.permute.xlu0 %174
      %v176 = vlaneseq
      %v177 = vand.u32 %v176, 127
      %v178 = vperm.slane %v166, %v177
      %v179 = vperm.slane %v169, %v177
      %v180 = vperm.slane %v172, %v177
      %v181 = vperm.slane %v175, %v177
      %vm182 = vcmask 1041409
      %v183 = vsel %vm182, %v179, %v178
      %vm184 = vcmask 1042434
      %v185 = vsel %vm184, %v180, %v183
      %vm186 = vcmask 1043459
      %v187 = vsel %vm186, %v181, %v185
      %vm189 = vcmask 60416
      %v190 = vsel %vm189, %v187, -inf
      %191 = vmax.xlane.f32.xlu0 %v190
      %v192 = vpop.xlane.xlu0 %191
      %v194 = vperm.slane %v192, 0
      %v195 = vperm.slane %v192, 1
      %v196 = vperm.slane %v192, 2
      %v197 = vperm.slane %v192, 3
      %v202 = vsub.f32 %v156, %v194
      %v203 = vsub.f32 %v157, %v195
      %v204 = vsub.f32 %v158, %v196
      %v205 = vsub.f32 %v159, %v197
      %v206 = vmul.f32 %v202, 1.442695
      %v207 = vpow.pop %v206
      %v208 = vmul.f32 %v203, 1.442695
      %v209 = vpow.pop %v208
      %v210 = vmul.f32 %v204, 1.442695
      %v211 = vpow.pop %v210
      %v212 = vmul.f32 %v205, 1.442695
      %v213 = vpow.pop %v212
      %218 = vset.pattern.permute.xlu0 0
      %219 = vperm.xlu0 %218, %v207
      %v220 = vpop.permute.xlu0 %219
      %221 = vset.pattern.permute.xlu0 0
      %222 = vperm.xlu0 %221, %v209
      %v223 = vpop.permute.xlu0 %222
      %224 = vset.pattern.permute.xlu0 0
      %225 = vperm.xlu0 %224, %v211
      %v226 = vpop.permute.xlu0 %225
      %227 = vset.pattern.permute.xlu0 0
      %228 = vperm.xlu0 %227, %v213
      %v229 = vpop.permute.xlu0 %228
      %v230 = vperm.slane %v220, %v177
      %v231 = vperm.slane %v223, %v177
      %v232 = vperm.slane %v226, %v177
      %v233 = vperm.slane %v229, %v177
      %v234 = vsel %vm182, %v231, %v230
      %v235 = vsel %vm184, %v232, %v234
      %v236 = vsel %vm186, %v233, %v235
      %v238 = vsel %vm189, %v236, 0.0
      %239 = vadd.xlane.f32.xlu0 %v238
      %v240 = vpop.xlane.xlu0 %239
      %v242 = vperm.slane %v240, 0
      %v243 = vperm.slane %v240, 1
      %v244 = vperm.slane %v240, 2
      %v245 = vperm.slane %v240, 3
      %v250 = vrcp.pop %v242
      %v251 = vmul.f32 %v242, %v250
      %v252 = vsub.f32 1.0, %v251
      %v253 = vmul.f32 %v250, %v252
      %v254 = vadd.f32 %v250, %v253
      %vm255 = vweird.f32 %v242
      %vm256 = vweird.f32 %v250
      %vm257 = vmor %vm255, %vm256
      %v258 = vsel %vm257, %v250, %v254
      %v259 = vand.u32 2147483647, %v242
      %vm260 = vcmp.eq.f32.partialorder %v259, 8.507059e+37
      %v261 = vand.u32 %v242, 2147483648
      %v262 = vor.u32 1.1754944e-38, %v261
      %v263 = vsel %vm260, %v262, %v258
      %v264 = vmul.f32 %v207, %v263
      %v265 = vrcp.pop %v243
      %v266 = vmul.f32 %v243, %v265
      %v267 = vsub.f32 1.0, %v266
      %v268 = vmul.f32 %v265, %v267
      %v269 = vadd.f32 %v265, %v268
      %vm270 = vweird.f32 %v243
      %vm271 = vweird.f32 %v265
      %vm272 = vmor %vm270, %vm271
      %v273 = vsel %vm272, %v265, %v269
      %v274 = vand.u32 2147483647, %v243
      %vm275 = vcmp.eq.f32.partialorder %v274, 8.507059e+37
      %v276 = vand.u32 %v243, 2147483648
      %v277 = vor.u32 1.1754944e-38, %v276
      %v278 = vsel %vm275, %v277, %v273
      %v279 = vmul.f32 %v209, %v278
      %v280 = vrcp.pop %v244
      %v281 = vmul.f32 %v244, %v280
      %v282 = vsub.f32 1.0, %v281
      %v283 = vmul.f32 %v280, %v282
      %v284 = vadd.f32 %v280, %v283
      %vm285 = vweird.f32 %v244
      %vm286 = vweird.f32 %v280
      %vm287 = vmor %vm285, %vm286
      %v288 = vsel %vm287, %v280, %v284
      %v289 = vand.u32 2147483647, %v244
      %vm290 = vcmp.eq.f32.partialorder %v289, 8.507059e+37
      %v291 = vand.u32 %v244, 2147483648
      %v292 = vor.u32 1.1754944e-38, %v291
      %v293 = vsel %vm290, %v292, %v288
      %v294 = vmul.f32 %v211, %v293
      %v295 = vrcp.pop %v245
      %v296 = vmul.f32 %v245, %v295
      %v297 = vsub.f32 1.0, %v296
      %v298 = vmul.f32 %v295, %v297
      %v299 = vadd.f32 %v295, %v298
      %vm300 = vweird.f32 %v245
      %vm301 = vweird.f32 %v295
      %vm302 = vmor %vm300, %vm301
      %v303 = vsel %vm302, %v295, %v299
      %v304 = vand.u32 2147483647, %v245
      %vm305 = vcmp.eq.f32.partialorder %v304, 8.507059e+37
      %v306 = vand.u32 %v245, 2147483648
      %v307 = vor.u32 1.1754944e-38, %v306
      %v308 = vsel %vm305, %v307, %v303
      %v309 = vmul.f32 %v213, %v308
      %311 = vset.pattern.permute.xlu0 0
      %312 = vperm.xlu0 %311, %v264
      %v313 = vpop.permute.xlu0 %312
      %v314 = vperm.slane %v313, %v177
      %vm315 = vcmask 64512
      %v316 = vsel %vm315, %v314, 0
      %318 = vmatpush.msra.mxu0 0.0
      %319 = vmatpush.msra.mxu0 0.0
      %320 = vmatpush.msra.mxu0 0.0
      %321 = vmatpush.msra.mxu0 0.0
      %322 = vmatpush.msra.mxu0 0.0
      %323 = vmatpush.msra.mxu0 0.0
      %324 = vmatpush.msra.mxu0 0.0
      %325 = vmatpush.msra.mxu0 0.0
      %326 = vmatpush.msra.mxu0 0.0
      %327 = vmatpush.msra.mxu0 0.0
      %328 = vmatpush.msra.mxu0 0.0
      %329 = vmatpush.msra.mxu0 0.0
      %330 = vmatpush.msra.mxu0 0.0
      %331 = vmatpush.msra.mxu0 0.0
      %332 = vmatpush.msra.mxu0 0.0
      %333 = vmatpush.msra.mxu0 %v103
      %334 = vmatmul.f32.gmra.mxu0 %v316
      %v335 = vpop.f32.mrf.mxu0
      %v336 = vadd.f32 0.0, %v335
      %337 = vdwg.mxu0
      %339 = vset.pattern.permute.xlu0 0
      %340 = vperm.xlu0 %339, %v279
      %v341 = vpop.permute.xlu0 %340
      %v342 = vperm.slane %v341, %v177
      %v343 = vsel %vm315, %v342, 0
      %345 = vmatpush.msra.mxu0 0.0
      %346 = vmatpush.msra.mxu0 0.0
      %347 = vmatpush.msra.mxu0 0.0
      %348 = vmatpush.msra.mxu0 0.0
      %349 = vmatpush.msra.mxu0 0.0
      %350 = vmatpush.msra.mxu0 0.0
      %351 = vmatpush.msra.mxu0 0.0
      %352 = vmatpush.msra.mxu0 0.0
      %353 = vmatpush.msra.mxu0 0.0
      %354 = vmatpush.msra.mxu0 0.0
      %355 = vmatpush.msra.mxu0 0.0
      %356 = vmatpush.msra.mxu0 0.0
      %357 = vmatpush.msra.mxu0 0.0
      %358 = vmatpush.msra.mxu0 0.0
      %359 = vmatpush.msra.mxu0 0.0
      %360 = vmatpush.msra.mxu0 %v104
      %361 = vmatmul.f32.gmra.mxu0 %v343
      %v362 = vpop.f32.mrf.mxu0
      %v363 = vadd.f32 0.0, %v362
      %364 = vdwg.mxu0
      %366 = vset.pattern.permute.xlu0 0
      %367 = vperm.xlu0 %366, %v294
      %v368 = vpop.permute.xlu0 %367
      %v369 = vperm.slane %v368, %v177
      %v370 = vsel %vm315, %v369, 0
      %372 = vmatpush.msra.mxu0 0.0
      %373 = vmatpush.msra.mxu0 0.0
      %374 = vmatpush.msra.mxu0 0.0
      %375 = vmatpush.msra.mxu0 0.0
      %376 = vmatpush.msra.mxu0 0.0
      %377 = vmatpush.msra.mxu0 0.0
      %378 = vmatpush.msra.mxu0 0.0
      %379 = vmatpush.msra.mxu0 0.0
      %380 = vmatpush.msra.mxu0 0.0
      %381 = vmatpush.msra.mxu0 0.0
      %382 = vmatpush.msra.mxu0 0.0
      %383 = vmatpush.msra.mxu0 0.0
      %384 = vmatpush.msra.mxu0 0.0
      %385 = vmatpush.msra.mxu0 0.0
      %386 = vmatpush.msra.mxu0 0.0
      %387 = vmatpush.msra.mxu0 %v105
      %388 = vmatmul.f32.gmra.mxu0 %v370
      %v389 = vpop.f32.mrf.mxu0
      %v390 = vadd.f32 0.0, %v389
      %391 = vdwg.mxu0
      %393 = vset.pattern.permute.xlu0 0
      %394 = vperm.xlu0 %393, %v309
      %v395 = vpop.permute.xlu0 %394
      %v396 = vperm.slane %v395, %v177
      %v397 = vsel %vm315, %v396, 0
      %399 = vmatpush.msra.mxu0 0.0
      %400 = vmatpush.msra.mxu0 0.0
      %401 = vmatpush.msra.mxu0 0.0
      %402 = vmatpush.msra.mxu0 0.0
      %403 = vmatpush.msra.mxu0 0.0
      %404 = vmatpush.msra.mxu0 0.0
      %405 = vmatpush.msra.mxu0 0.0
      %406 = vmatpush.msra.mxu0 0.0
      %407 = vmatpush.msra.mxu0 0.0
      %408 = vmatpush.msra.mxu0 0.0
      %409 = vmatpush.msra.mxu0 0.0
      %410 = vmatpush.msra.mxu0 0.0
      %411 = vmatpush.msra.mxu0 0.0
      %412 = vmatpush.msra.mxu0 0.0
      %413 = vmatpush.msra.mxu0 0.0
      %414 = vmatpush.msra.mxu0 %v106
      %415 = vmatmul.f32.gmra.mxu0 %v397
      %v416 = vpop.f32.mrf.mxu0
      %v417 = vadd.f32 0.0, %v416
      %418 = vdwg.mxu0
      %v419 = vld [vmem:[%s7] sm:$0xff]
      %v420 = vld [vmem:[%s7 + $0x8] sm:$0xff]
      %v421 = vld [vmem:[%s7 + $0x10] sm:$0xff]
      %v422 = vld [vmem:[%s7 + $0x18] sm:$0xff]
      %v423 = vld [vmem:[%s7 + $0x20] sm:$0xff]
      %v424 = vld [vmem:[%s7 + $0x28] sm:$0xff]
      %v425 = vld [vmem:[%s7 + $0x30] sm:$0xff]
      %v426 = vld [vmem:[%s7 + $0x38] sm:$0xff]
      %v427 = vld [vmem:[%s0] sm:$0xf]
      %v428 = vld [vmem:[#allocation3] sm:$0xff]
      %v429 = vld [vmem:[#allocation3 + $0x8] sm:$0xff]
      %v430 = vld [vmem:[#allocation3 + $0x10] sm:$0xff]
      %v431 = vld [vmem:[#allocation3 + $0x18] sm:$0xff]
      %vm432 = vcmask 261120
      %v434 = vsel %vm432, %v427, 0
      %436 = vmatpush.msra.mxu0 0.0
      %437 = vmatpush.msra.mxu0 0.0
      %438 = vmatpush.msra.mxu0 0.0
      %439 = vmatpush.msra.mxu0 0.0
      %440 = vmatpush.msra.mxu0 0.0
      %441 = vmatpush.msra.mxu0 0.0
      %442 = vmatpush.msra.mxu0 0.0
      %443 = vmatpush.msra.mxu0 0.0
      %444 = vmatpush.msra.mxu0 0.0
      %445 = vmatpush.msra.mxu0 0.0
      %446 = vmatpush.msra.mxu0 0.0
      %447 = vmatpush.msra.mxu0 0.0
      %448 = vmatpush.msra.mxu0 %v431
      %449 = vmatpush.msra.mxu0 %v430
      %450 = vmatpush.msra.mxu0 %v429
      %451 = vmatpush.msra.mxu0 %v428
      %452 = vmatmul.f32.gmra.mxu0 %v434
      %v453 = vpop.f32.mrf.mxu0
      %v454 = vadd.f32 0.0, %v453
      %455 = vdwg.mxu0
      %v460 = vrot.slane %v363, 7
      %v461 = vsel %vm182, %v460, %v336
      %v462 = vrot.slane %v390, 6
      %v463 = vsel %vm184, %v462, %v461
      %v464 = vrot.slane %v417, 5
      %v465 = vsel %vm186, %v464, %v463
      %v466 = vsel %vm124, %v465, 0
      %468 = vmatpush.msra.mxu0 0.0
      %469 = vmatpush.msra.mxu0 0.0
      %470 = vmatpush.msra.mxu0 0.0
      %471 = vmatpush.msra.mxu0 0.0
      %472 = vmatpush.msra.mxu0 0.0
      %473 = vmatpush.msra.mxu0 0.0
      %474 = vmatpush.msra.mxu0 0.0
      %475 = vmatpush.msra.mxu0 0.0
      %476 = vmatpush.msra.mxu0 %v426
      %477 = vmatpush.msra.mxu0 %v425
      %478 = vmatpush.msra.mxu0 %v424
      %479 = vmatpush.msra.mxu0 %v423
      %480 = vmatpush.msra.mxu0 %v422
      %481 = vmatpush.msra.mxu0 %v421
      %482 = vmatpush.msra.mxu0 %v420
      %483 = vmatpush.msra.mxu0 %v419
      %484 = vmatmul.f32.gmra.mxu0 %v466
      %v485 = vpop.f32.mrf.mxu0
      %v486 = vadd.f32 %v454, %v485
      %487 = vdwg.mxu0
      %v488 = vld [vmem:[#allocation6] sm:$0xff]
      %v489 = vld [vmem:[#allocation6 + $0x8] sm:$0xff]
      %v490 = vld [vmem:[#allocation6 + $0x10] sm:$0xff]
      %v491 = vld [vmem:[#allocation6 + $0x18] sm:$0xff]
      %v493 = vsel %vm432, %v101, 0
      %495 = vmatpush.msra.mxu0 0.0
      %496 = vmatpush.msra.mxu0 0.0
      %497 = vmatpush.msra.mxu0 0.0
      %498 = vmatpush.msra.mxu0 0.0
      %499 = vmatpush.msra.mxu0 0.0
      %500 = vmatpush.msra.mxu0 0.0
      %501 = vmatpush.msra.mxu0 0.0
      %502 = vmatpush.msra.mxu0 0.0
      %503 = vmatpush.msra.mxu0 0.0
      %504 = vmatpush.msra.mxu0 0.0
      %505 = vmatpush.msra.mxu0 0.0
      %506 = vmatpush.msra.mxu0 0.0
      %507 = vmatpush.msra.mxu0 %v491
      %508 = vmatpush.msra.mxu0 %v490
      %509 = vmatpush.msra.mxu0 %v489
      %510 = vmatpush.msra.mxu0 %v488
      %511 = vmatmul.f32.gmra.mxu0 %v493
      %v512 = vpop.f32.mrf.mxu0
      %v513 = vadd.f32 0.0, %v512
      %514 = vdwg.mxu0
      %v515 = vadd.f32 %v486, %v513
      %v516 = vld [vmem:[%s10] sm:$0x1]
      %v518 = vperm.slane %v516, 0
      %v520 = vadd.f32 %v515, %v518
      %v521 = vxor.u32 %v520, 2147483648
      %v522 = vmul.f32 %v521, 1.442695
      %v523 = vpow.pop %v522
      %v524 = vadd.f32 %v523, 1.0
      %v525 = vrcp.pop %v524
      %v526 = vmul.f32 %v524, %v525
      %v527 = vsub.f32 1.0, %v526
      %v528 = vmul.f32 %v525, %v527
      %v529 = vadd.f32 %v525, %v528
      %vm530 = vweird.f32 %v524
      %vm531 = vweird.f32 %v525
      %vm532 = vmor %vm530, %vm531
      %v533 = vsel %vm532, %v525, %v529
      %v534 = vand.u32 2147483647, %v524
      %vm535 = vcmp.eq.f32.partialorder %v534, 8.507059e+37
      %v536 = vand.u32 %v524, 2147483648
      %v537 = vor.u32 1.1754944e-38, %v536
      %v538 = vsel %vm535, %v537, %v533
      %v539 = vmul.f32 1.0, %v538
      %v540 = vtanh.pop %v520
      %542 = vrot.lane.b32.xlu0 %v102, 32
      %v543 = vpop.permute.xlu0 %542
      %v545 = vmul.f32 %v539, %v543
      %547 = vrot.lane.b32.xlu0 %v540, 64
      %v548 = vpop.permute.xlu0 %547
      %v550 = vmul.f32 %v539, %v548
      %552 = vrot.lane.b32.xlu0 %v550, 32
      %v553 = vpop.permute.xlu0 %552
      %v555 = vadd.f32 %v545, %v553
      %v556 = vtanh.pop %v555
      %558 = vrot.lane.b32.xlu0 %v556, 64
      %v559 = vpop.permute.xlu0 %558
      %v561 = vmul.f32 %v539, %v559
      %563 = vrot.lane.b32.xlu0 %v561, 32
      %v564 = vpop.permute.xlu0 %563
      %566 = vst.msk [vmem:[#allocation10] sm:$0xf] %vm112, %v564
      %568 = vrot.lane.b32.xlu0 %v555, 96
      %v569 = vpop.permute.xlu0 %568
      %571 = vst.msk [vmem:[#allocation12] sm:$0xf] %vm112, %v569
    $region69: #{decoder_forward.1} parent=1 // pred_fallthru
      _
    %v572 = vld [vmem:[#allocation10] sm:$0xf]
    %v573 = vld [vmem:[#allocation8] sm:$0xff]
    %v574 = vld [vmem:[#allocation8 + $0x8] sm:$0xff]
    %v575 = vld [vmem:[#allocation8 + $0x10] sm:$0xff]
    %v576 = vld [vmem:[#allocation8 + $0x18] sm:$0xff]
    %v577 = vld [vmem:[%s12] sm:$0x1]
    %v579 = vperm.slane %v577, 0
    %vm581 = vcmask 261120
    %v583 = vsel %vm581, %v572, 0
    %585 = vmatpush.msra.mxu0 0.0
    %586 = vmatpush.msra.mxu0 0.0
    %587 = vmatpush.msra.mxu0 0.0
    %588 = vmatpush.msra.mxu0 0.0
    %589 = vmatpush.msra.mxu0 0.0
    %590 = vmatpush.msra.mxu0 0.0
    %591 = vmatpush.msra.mxu0 0.0
    %592 = vmatpush.msra.mxu0 0.0
    %593 = vmatpush.msra.mxu0 0.0
    %594 = vmatpush.msra.mxu0 0.0
    %595 = vmatpush.msra.mxu0 0.0
    %596 = vmatpush.msra.mxu0 0.0
    %597 = vmatpush.msra.mxu0 %v576
    %598 = vmatpush.msra.mxu0 %v575
    %599 = vmatpush.msra.mxu0 %v574
    %600 = vmatpush.msra.mxu0 %v573
    %601 = vmatmul.f32.gmra.mxu0 %v583
    %v602 = vpop.f32.mrf.mxu0
    %v603 = vadd.f32 %v579, %v602
    %604 = vdwg.mxu0
    %605 = vst [vmem:[#allocation9] sm:$0xf] %v603
    // Predicated region
    $region70: #{decoder_forward.1} parent=1 // pred_check
      _
    $region71: #{decoder_forward.1} parent=1 // pred_check_branch
      %607 = sbr.rel (0) target = $region73
    $region72: #{decoder_forward.1} parent=1 // pred_region
      %609 = vsyncadd [#allocation5], 0
      %s611 = sshll.u32 [#allocation9], 4
      %s612 = int_to_ptr.vmem [resolvable:$true] %s611
      %s613 = sshll.u32 %s13, 4
      %s614 = int_to_ptr.hbm [resolvable:$true] %s613
      %616 = dma.vmem_to_hbm [thread:$0]  %s612, 64, %s614, [#allocation5]
    $region73: #{decoder_forward.1} parent=1 // pred_fallthru
      _
    // Predicated region
    $region74: #{decoder_forward.1} parent=1 // pred_check
      _
    $region75: #{decoder_forward.1} parent=1 // pred_check_branch
      %618 = sbr.rel (0) target = $region77
    $region76: #{decoder_forward.1} parent=1 // pred_region
      %620 = vsyncadd [#allocation11], 0
      %s622 = sshll.u32 [#allocation10], 4
      %s623 = int_to_ptr.vmem [resolvable:$true] %s622
      %s624 = sshll.u32 %s14, 4
      %s625 = int_to_ptr.hbm [resolvable:$true] %s624
      %627 = dma.vmem_to_hbm [thread:$0]  %s623, 64, %s625, [#allocation11]
    $region77: #{decoder_forward.1} parent=1 // pred_fallthru
      _
    // Predicated region
    $region78: #{decoder_forward.1} parent=1 // pred_check
      _
    $region79: #{decoder_forward.1} parent=1 // pred_check_branch
      %629 = sbr.rel (0) target = $region81
    $region80: #{decoder_forward.1} parent=1 // pred_region
      %631 = vsyncadd [#allocation11], 0
      %s633 = sshll.u32 [#allocation12], 4
      %s634 = int_to_ptr.vmem [resolvable:$true] %s633
      %s635 = sshll.u32 %s15, 4
      %s636 = int_to_ptr.hbm [resolvable:$true] %s635
      %638 = dma.vmem_to_hbm [thread:$0]  %s634, 64, %s636, [#allocation11]
    $region81: #{decoder_forward.1} parent=1 // pred_fallthru
      _
    // Predicated region
    $region82: #{decoder_forward.1} parent=1 // pred_check
      _
    $region83: #{decoder_forward.1} parent=1 // pred_check_branch
      %640 = sbr.rel (0) target = $region85
    $region84: #{decoder_forward.1} parent=1 // pred_region
      %642 = dma.done [#allocation5], 64
    $region85: #{decoder_forward.1} parent=1 // pred_fallthru
      _
    // Predicated region
    $region86: #{decoder_forward.1} parent=1 // pred_check
      _
    $region87: #{decoder_forward.1} parent=1 // pred_check_branch
      %644 = sbr.rel (0) target = $region89
    $region88: #{decoder_forward.1} parent=1 // pred_region
      %646 = dma.done [#allocation11], 64
    $region89: #{decoder_forward.1} parent=1 // pred_fallthru
      _
    // Predicated region
    $region90: #{decoder_forward.1} parent=1 // pred_check
      _
    $region91: #{decoder_forward.1} parent=1 // pred_check_branch
      %648 = sbr.rel (0) target = $region93
    $region92: #{decoder_forward.1} parent=1 // pred_region
      %650 = dma.done [#allocation11], 64
    $region93: #{decoder_forward.1} parent=1 // pred_fallthru
      _
    %651 = vsyncpa [#allocation4], 1
    %652 = vsyncpa [#allocation7], 1
    %653 = vsyncpa [#allocation5], 1
    %654 = vsyncpa [#allocation11], 1

</llo_original>
